<compile_context>
chip_gen: v6e
topology: v6e:2x2x1
jax: 0.10.0
libtpu: 0.0.40
codegen_flags: <defaults>
</compile_context>

<pallas_src>
import functools

import jax
import jax.numpy as jnp
from jax.experimental import pallas as pl
from jax.experimental.pallas import tpu as pltpu


def _round_up(v, m):
    return (v + m - 1) // m * m


def _softass_kernel(x_ref, dict_t_ref, o_ref, *, defer_norm):
    # x_ref:      (TN, D)      tile of input rows (full feature dim)
    # dict_t_ref: (D, W_pad)   pre-transposed bf16 codebook (zero-padded cols)
    # o_ref:      (TN, W_pad)  output tile
    x = x_ref[...].astype(jnp.float32)

    # numerically-stable softmax over the feature axis, in f32
    m = jnp.max(x, axis=-1, keepdims=True)
    e = jnp.exp(x - m)
    denom = jnp.sum(e, axis=-1, keepdims=True)
    inv = pl.reciprocal(denom, approx=True)       # EUP vrcp; essentially free

    if defer_norm:
        # softmax is linear in its unnormalized numerator: fold 1/denom into
        # the smaller (TN, W_pad) matmul result instead of the (TN, D) operand.
        acc = jnp.dot(e.astype(jnp.bfloat16), dict_t_ref[...],
                      preferred_element_type=jnp.float32)
        res = acc * inv
    else:
        p = e * inv
        res = jnp.dot(p.astype(jnp.bfloat16), dict_t_ref[...],
                      preferred_element_type=jnp.float32)

    o_ref[...] = res.astype(o_ref.dtype)


def _vmem_limits():
    """Per-generation (vmem_limit_bytes, tile budget)."""
    phys = None
    try:
        phys = getattr(pltpu.get_tpu_info(), "vmem_capacity_bytes", None)
    except Exception:
        phys = None
    if phys is None:
        phys = 64 * 1024 * 1024              # v7x-conservative fallback
    if phys >= 128 * 1024 * 1024:            # v5e / v6e: 128 MiB physical
        limit = 100 * 1024 * 1024
    else:                                    # v7x: 64 MiB physical, 32 scoped
        limit = 32 * 1024 * 1024
    budget = limit - 6 * 1024 * 1024         # headroom for Mosaic scratch
    return limit, budget


def soft_ass_forward(x, codebook, *, row_tile=None, out_dtype=None):
    """Pallas implementation of SoftAss.forward (eval mode, softmax=True).

    x:        (N, D) float array
    codebook: (W, D) float array (the nn.Parameter `dict`)
    returns:  (N, W) array (x.dtype unless out_dtype is given)
    """
    N, D = x.shape
    W, D2 = codebook.shape
    assert D == D2, "features_dim mismatch"

    out_dtype = x.dtype if out_dtype is None else out_dtype
    x_bytes = jnp.dtype(x.dtype).itemsize
    o_bytes = jnp.dtype(out_dtype).itemsize

    # Lane-dense output: pad codebook words to 128 (256-aligned for larger W,
    # keeping v6e/v7x's 256-wide MXU passes full).  The feature axis stays at
    # the true D: no wrapper-side HBM pad copy of x.
    W_pad = _round_up(W, 128) if W <= 128 else _round_up(W, 256)

    vmem_limit, budget = _vmem_limits()

    # TODO(synk): for very large D the (row_tile, D) + (D, W_pad) blocks won't
    # fit VMEM simultaneously; that needs a feature-axis grid split with a
    # two-pass softmax and a VMEM f32 accumulator (follow-up).
    if row_tile is None:
        codebook_bytes = D * W_pad * 2                        # bf16, single-buffered
        per_row = (2 * D * x_bytes + 2 * W_pad * o_bytes      # double-buffered tiles
                   + 10 * D + 4 * W_pad)                      # f32/bf16 temporaries
        cap = max(16, (budget - codebook_bytes) // per_row)
        row_tile = int(min(1024, cap))
        # Guarantee >= 4 grid steps for large batches (2 per v7x TensorCore,
        # keeps the row pipeline double-buffered).
        row_tile = min(row_tile, max(16, _round_up(pl.cdiv(N, 4), 16)))
        if row_tile >= 256:
            row_tile = (row_tile // 256) * 256                # full MXU passes
        else:
            row_tile = max(16, (row_tile // 16) * 16)         # bf16 sublane packing

    # Pad the batch so the grid divides evenly (padded rows sliced off below).
    N_pad = _round_up(N, row_tile)
    x_p = jnp.pad(x, ((0, N_pad - N), (0, 0))) if N_pad != N else x

    # Pre-transposed bf16 codebook (D, W_pad); zero-padded columns keep the
    # real output columns exact.
    dict_t = codebook.astype(jnp.bfloat16).T
    if W_pad != W:
        dict_t = jnp.pad(dict_t, ((0, 0), (0, W_pad - W)))

    grid = (N_pad // row_tile,)

    cost = pl.CostEstimate(
        flops=2 * N_pad * W_pad * D,
        transcendentals=N_pad * D,
        bytes_accessed=(N_pad * D * x_bytes
                        + D * W_pad * 2
                        + N_pad * W_pad * o_bytes),
    )

    kernel = functools.partial(_softass_kernel, defer_norm=D >= W_pad)

    out = pl.pallas_call(
        kernel,
        out_shape=jax.ShapeDtypeStruct((N_pad, W_pad), out_dtype),
        grid_spec=pl.GridSpec(
            grid=grid,
            in_specs=[
                # x row tile (full feature dim; default double-buffering)
                pl.BlockSpec((row_tile, D), lambda i: (i, 0)),
                # codebook: constant block -> keep a single resident VMEM copy
                pl.BlockSpec((D, W_pad), lambda i: (0, 0),
                             pipeline_mode=pl.Buffered(1)),
            ],
            out_specs=pl.BlockSpec((row_tile, W_pad), lambda i: (i, 0)),
        ),
        compiler_params=pltpu.CompilerParams(
            dimension_semantics=("parallel",),
            vmem_limit_bytes=vmem_limit,
        ),
        cost_estimate=cost,
    )(x_p, dict_t)

    # Slice off the N / W padding.
    return out[:N, :W]


def soft_ass_reference(x, codebook):
    p = jax.nn.softmax(x.astype(jnp.float32), axis=-1)
    return jnp.tensordot(p, codebook.astype(jnp.float32),
                         axes=([1], [1])).astype(x.dtype)


if __name__ == "__main__":
    key = jax.random.PRNGKey(0)

    # Case 1: SoftAss(num_words=16, features_dim=32) on a batch of 8 vectors
    # (exercises the normalize-before-matmul path, single grid step).
    # Case 2: features_dim=256, batch=40 (exercises the deferred-normalization
    # path, multi-step row grid, and row padding).
    cases = [(8, 32, 16), (40, 256, 16)]

    for batch, features_dim, num_words in cases:
        key, k_x, k_dict = jax.random.split(key, 3)
        x = jax.random.normal(k_x, (batch, features_dim), dtype=jnp.float32)
        # nn.Parameter(torch.rand(num_words, features_dim)) -> uniform [0, 1)
        codebook = jax.random.uniform(k_dict, (num_words, features_dim),
                                      dtype=jnp.float32)

        out = jax.block_until_ready(soft_ass_forward(x, codebook))
        ref = soft_ass_reference(x, codebook)

        assert out.shape == (batch, num_words)
        # bf16 MXU operands + approx reciprocal give ~1e-3 relative deviation
        # vs. the pure-f32 reference; tolerance loosened accordingly.
        assert jnp.allclose(out, ref, atol=2e-2, rtol=2e-2), \
            f"mismatch vs reference for shape {(batch, features_dim, num_words)}"

    # TODO(synk): training-mode reset_codebook (scipy kmeans2 on host) and the
    # softmax=False L2-normalize branch have no Pallas equivalent; only the
    # eval forward pass (softmax=True) is implemented.
    print("KERNEL_OK")
</pallas_src>

<mosaic_0001>
module attributes {stable_mosaic.version = 11 : i64} {
  func.func @_softass_kernel(%arg0: i32, %arg1: memref<16x32xf32, #tpu.memory_space<vmem>>, %arg2: memref<32x128xbf16, #tpu.memory_space<vmem>>, %arg3: memref<16x128xf32, #tpu.memory_space<vmem>>) attributes {dimension_semantics = [#tpu.dimension_semantics<parallel>], iteration_bounds = array<i64: 1>, scalar_prefetch = 0 : i64, scratch_operands = 0 : i64, tpu.core_type = #tpu.core_type<tc>, window_params = [{transform_indices = @transform_0, window_bounds = array<i64: 16, 32>}, {pipeline_mode = #tpu.pipeline_mode<synchronous>, transform_indices = @transform_1, window_bounds = array<i64: 32, 128>}, {transform_indices = @transform_2, window_bounds = array<i64: 16, 128>}]} {
    %c0 = arith.constant 0 : index
    %c0_0 = arith.constant 0 : index
    %0 = vector.load %arg1[%c0, %c0_0] : memref<16x32xf32, #tpu.memory_space<vmem>>, vector<16x32xf32>
    %cst = arith.constant dense<0xFF800000> : vector<16xf32>
    %1 = vector.multi_reduction <maximumf>, %0, %cst [1] : vector<16x32xf32> to vector<16xf32>
    %2 = vector.shape_cast %1 : vector<16xf32> to vector<16x1xf32>
    %3 = vector.broadcast %2 : vector<16x1xf32> to vector<16x32xf32>
    %4 = arith.subf %0, %3 : vector<16x32xf32>
    %5 = math.exp %4 : vector<16x32xf32>
    %cst_1 = arith.constant dense<0.000000e+00> : vector<16xf32>
    %6 = vector.multi_reduction <add>, %5, %cst_1 [1] : vector<16x32xf32> to vector<16xf32>
    %7 = vector.shape_cast %6 : vector<16xf32> to vector<16x1xf32>
    %8 = tpu.reciprocal %7 {approx = true} : vector<16x1xf32> -> vector<16x1xf32>
    %9 = vector.broadcast %8 : vector<16x1xf32> to vector<16x32xf32>
    %10 = arith.mulf %5, %9 : vector<16x32xf32>
    %11 = arith.truncf %10 : vector<16x32xf32> to vector<16x32xbf16>
    %c0_2 = arith.constant 0 : index
    %c0_3 = arith.constant 0 : index
    %12 = vector.load %arg2[%c0_2, %c0_3] : memref<32x128xbf16, #tpu.memory_space<vmem>>, vector<32x128xbf16>
    %cst_4 = arith.constant dense<0.000000e+00> : vector<16x128xf32>
    %13 = tpu.matmul %11, %12, %cst_4 {dimension_numbers = #tpu.dot_dimension_numbers<[1], [0], [0], [1], [0, 0, 1, 1], [], []>} : vector<16x32xbf16>, vector<32x128xbf16>, vector<16x128xf32> -> vector<16x128xf32>
    %c0_5 = arith.constant 0 : index
    %c0_6 = arith.constant 0 : index
    %14 = vector.load %arg3[%c0_5, %c0_6] : memref<16x128xf32, #tpu.memory_space<vmem>>, vector<16x128xf32>
    tpu.vector_store %arg3[%c0_5, %c0_6], %13 {strides = array<i32>} : memref<16x128xf32, #tpu.memory_space<vmem>>, vector<16x128xf32>,
    return
  }
  func.func @transform_0(%arg0: i32) -> (i32, i32) {
    %c0_i32 = arith.constant 0 : i32
    %c0_i32_0 = arith.constant 0 : i32
    return %arg0, %c0_i32 : i32, i32
  }
  func.func @transform_1(%arg0: i32) -> (i32, i32) {
    %c0_i32 = arith.constant 0 : i32
    %c0_i32_0 = arith.constant 0 : i32
    %c0_i32_1 = arith.constant 0 : i32
    return %c0_i32, %c0_i32_0 : i32, i32
  }
  func.func @transform_2(%arg0: i32) -> (i32, i32) {
    %c0_i32 = arith.constant 0 : i32
    %c0_i32_0 = arith.constant 0 : i32
    return %arg0, %c0_i32 : i32, i32
  }
}

</mosaic_0001>

<llo_original>
// kernel: tpu_custom_call.1
$region0: #{tpu_custom_call.1}
  #allocation0 [shape = 'u32[]', space=smem, size = 0x4, offset = 0x4, fixed_abs, tag = 'smem constant byte address 0x4 - core index']
  #allocation1 [shape = 'u32[144,128]{1,0:T(1,128)}', space=vmem, size = 0x12000, scoped, tag = 'internal scratch']
  %s0 = inlined_call_operand.hbm [shape: f32[16,32], index: 0, kind: input, shape index: {}]
  %s1 = inlined_call_operand.hbm [shape: bf16[32,128], index: 1, kind: input, shape index: {}]
  %s2 = inlined_call_operand.hbm [shape: f32[16,128], index: 2, kind: output, shape index: {}]
  %s3 = sld [smem:[#allocation0]]
  $region26: #{tpu_custom_call.1} parent=0
    _
  %s5 = ssub.s32 1, %s3
  %s6 = scalar_select 0, %s5, %s3
  $region1: #{tpu_custom_call.1} parent=0
    #allocation2 [shape = 'u8[8192]{0}', space=vmem, size = 0x2000, scoped, tag = 'input window, operand 0, single buffered']
    #allocation3 [shape = 's32[1]{0}', space=sflag, size = 0x4, scoped, tag = 'scoped memory for tpu_custom_call.1']
    #allocation4 [shape = 's32[1]{0}', space=sflag, size = 0x4, scoped, tag = 'scoped memory for tpu_custom_call.1']
    #allocation5 [shape = 'u8[8192]{0}', space=vmem, size = 0x2000, scoped, tag = 'input window, operand 1, single buffered']
    #allocation6 [shape = 's32[1]{0}', space=sflag, size = 0x4, scoped, tag = 'scoped memory for tpu_custom_call.1']
    #allocation7 [shape = 'u8[8192]{0}', space=vmem, size = 0x2000, scoped, tag = 'output window, operand 0, single buffered']
    %7 = vsyncpa [#allocation3], 0
    %8 = vsyncpa [#allocation6], 0
    %9 = vsyncpa [#allocation4], 0
    // Predicated region
    $region2: #{tpu_custom_call.1} parent=1 // pred_check
      _
    $region3: #{tpu_custom_call.1} parent=1 // pred_check_branch
      %11 = sbr.rel (0) target = $region5
    $region4: #{tpu_custom_call.1} parent=1 // pred_region
      %s13 = ssub.s32 256, 256
      %14 = vsyncadd [#allocation3], %s13
      %s15 = sshll.u32 [#allocation2], 4
      %s16 = int_to_ptr.vmem [resolvable:$true] %s15
      %21 = dma.hbm_to_vmem [thread:$0]  %s0, 256, %s16, [#allocation3], 128, 128, 8
    $region5: #{tpu_custom_call.1} parent=1 // pred_fallthru
      _
    // Predicated region
    $region6: #{tpu_custom_call.1} parent=1 // pred_check
      _
    $region7: #{tpu_custom_call.1} parent=1 // pred_check_branch
      %23 = sbr.rel (0) target = $region9
    $region8: #{tpu_custom_call.1} parent=1 // pred_region
      %s25 = ssub.s32 256, 256
      %26 = vsyncadd [#allocation6], %s25
      %s27 = sshll.u32 [#allocation5], 4
      %s28 = int_to_ptr.vmem [resolvable:$true] %s27
      %33 = dma.hbm_to_vmem [thread:$0]  %s1, 256, %s28, [#allocation6], 64, 64, 4
    $region9: #{tpu_custom_call.1} parent=1 // pred_fallthru
      _
    // Predicated region
    $region10: #{tpu_custom_call.1} parent=1 // pred_check
      _
    $region11: #{tpu_custom_call.1} parent=1 // pred_check_branch
      %35 = sbr.rel (0) target = $region13
    $region12: #{tpu_custom_call.1} parent=1 // pred_region
      %36 = dma.done [#allocation3], 256
    $region13: #{tpu_custom_call.1} parent=1 // pred_fallthru
      _
    // Predicated region
    $region14: #{tpu_custom_call.1} parent=1 // pred_check
      _
    $region15: #{tpu_custom_call.1} parent=1 // pred_check_branch
      %38 = sbr.rel (0) target = $region17
    $region16: #{tpu_custom_call.1} parent=1 // pred_region
      %39 = dma.done [#allocation6], 256
    $region17: #{tpu_custom_call.1} parent=1 // pred_fallthru
      _
    %v41 = vld [vmem:[#allocation2] sm:$0xff]
    %v42 = vld [vmem:[#allocation2 + $0x8] sm:$0xff]
    %vm43 = vcmask 261120
    %v44 = vsel %vm43, %v41, -inf
    %45 = vmax.xlane.f32.xlu0 %v44
    %v46 = vpop.xlane.xlu0 %45
    %v47 = vsel %vm43, %v42, -inf
    %48 = vmax.xlane.f32.xlu0 %v47
    %v49 = vpop.xlane.xlu0 %48
    %v50 = vsub.f32 %v41, %v46
    %v51 = vsub.f32 %v42, %v49
    %v52 = vmul.f32 %v50, 1.442695
    %v53 = vpow.pop %v52
    %v54 = vmul.f32 %v51, 1.442695
    %v55 = vpow.pop %v54
    %v56 = vsel %vm43, %v53, 0.0
    %57 = vadd.xlane.f32.xlu0 %v56
    %v58 = vpop.xlane.xlu0 %57
    %v59 = vsel %vm43, %v55, 0.0
    %60 = vadd.xlane.f32.xlu0 %v59
    %v61 = vpop.xlane.xlu0 %60
    %v62 = vrcp.pop %v58
    %v63 = vrcp.pop %v61
    %v64 = vmul.f32 %v53, %v62
    %v65 = vmul.f32 %v55, %v63
    %v66 = vpack.c.bf16 %v65, %v64
    %v67 = vld [vmem:[#allocation5] sm:$0xf]
    %v68 = vld [vmem:[#allocation5 + $0x4] sm:$0xf]
    %v69 = vld [vmem:[#allocation5 + $0x8] sm:$0xf]
    %v70 = vld [vmem:[#allocation5 + $0xc] sm:$0xf]
    %v75 = vunpack.c.l.b16 %v67
    %v76 = vunpack.c.l.b16 %v68
    %v77 = vunpack.c.l.b16 %v69
    %v78 = vunpack.c.l.b16 %v70
    %v79 = vpack.c.b16 %v76, %v75
    %v80 = vpack.c.b16 %v78, %v77
    %v84 = vsel %vm43, %v66, 0
    %86 = vmatprep.subr.bf16.mxu0 0
    %87 = vmatpush1.bf16.msra.mxu0 0
    %88 = vmatprep.subr.bf16.mxu0 0
    %89 = vmatpush1.bf16.msra.mxu0 0
    %90 = vmatprep.subr.bf16.mxu0 0
    %91 = vmatpush1.bf16.msra.mxu0 0
    %92 = vmatprep.subr.bf16.mxu0 0
    %93 = vmatpush1.bf16.msra.mxu0 0
    %94 = vmatprep.subr.bf16.mxu0 0
    %95 = vmatpush1.bf16.msra.mxu0 0
    %96 = vmatprep.subr.bf16.mxu0 0
    %97 = vmatpush1.bf16.msra.mxu0 0
    %98 = vmatprep.subr.bf16.mxu0 0
    %99 = vmatpush1.bf16.msra.mxu0 %v80
    %100 = vmatprep.subr.bf16.mxu0 0
    %101 = vmatpush1.bf16.msra.mxu0 %v79
    %102 = vmatprep.subr.bf16.mxu0 0
    %103 = vmatpush2.bf16.msra.mxu0 0
    %104 = vmatprep.subr.bf16.mxu0 0
    %105 = vmatpush2.bf16.msra.mxu0 0
    %106 = vmatprep.subr.bf16.mxu0 0
    %107 = vmatpush2.bf16.msra.mxu0 0
    %108 = vmatprep.subr.bf16.mxu0 0
    %109 = vmatpush2.bf16.msra.mxu0 0
    %110 = vmatprep.subr.bf16.mxu0 0
    %111 = vmatpush2.bf16.msra.mxu0 0
    %112 = vmatprep.subr.bf16.mxu0 0
    %113 = vmatpush2.bf16.msra.mxu0 0
    %114 = vmatprep.subr.bf16.mxu0 0
    %115 = vmatpush2.bf16.msra.mxu0 0
    %116 = vmatprep.subr.bf16.mxu0 0
    %117 = vmatpush2.bf16.msra.mxu0 0
    %118 = vmatprep.mubr.bf16.mxu0 0
    %119 = vmatmul.mubr.bf16.gmra.mxu0 %v84
    %v120 = vpop.f32.mrf.mxu0
    %v121 = vadd.f32 0.0, %v120
    %v122 = vpop.f32.mrf.mxu0
    %v123 = vpop.f32.mrf.mxu0
    %v124 = vadd.f32 0.0, %v123
    %v125 = vpop.f32.mrf.mxu0
    %126 = vdwg.mxu0
    %127 = vst [vmem:[#allocation7] sm:$0xff] %v121
    %128 = vst [vmem:[#allocation7 + $0x8] sm:$0xff] %v124
    // Predicated region
    $region18: #{tpu_custom_call.1} parent=1 // pred_check
      _
    $region19: #{tpu_custom_call.1} parent=1 // pred_check_branch
      %130 = sbr.rel (0) target = $region21
    $region20: #{tpu_custom_call.1} parent=1 // pred_region
      %s132 = ssub.s32 256, 256
      %133 = vsyncadd [#allocation4], %s132
      %s134 = sshll.u32 [#allocation7], 4
      %s135 = int_to_ptr.vmem [resolvable:$true] %s134
      %140 = dma.vmem_to_hbm [thread:$0]  %s135, 256, %s2, [#allocation4], 128, 128, 8
    $region21: #{tpu_custom_call.1} parent=1 // pred_fallthru
      _
    // Predicated region
    $region22: #{tpu_custom_call.1} parent=1 // pred_check
      _
    $region23: #{tpu_custom_call.1} parent=1 // pred_check_branch
      %142 = sbr.rel (0) target = $region25
    $region24: #{tpu_custom_call.1} parent=1 // pred_region
      %143 = dma.done [#allocation4], 256
    $region25: #{tpu_custom_call.1} parent=1 // pred_fallthru
      _
    %144 = vsyncpa [#allocation3], 1
    %145 = vsyncpa [#allocation6], 1
    %146 = vsyncpa [#allocation4], 1

</llo_original>
